<compile_context>
chip_gen: v5e
topology: v5e:2x2
jax: 0.10.0
libtpu: 0.0.40
codegen_flags: <defaults>
</compile_context>

<pallas_src>
import jax
import jax.numpy as jnp
from jax import lax
from jax.experimental import pallas as pl
from jax.experimental.pallas import tpu as pltpu


def _round_up(x, m):
    return (x + m - 1) // m * m


def _choose_row_tile(m):
    """Largest of (512, 256, 128) keeping >=2 tiles per axis and <=25% padding."""
    if m <= 128:
        return 128
    for cand in (512, 256, 128):
        padded = _round_up(m, cand)
        if padded // cand >= 2 and (padded - m) * 4 <= padded:
            return cand
    return 128


def _gauss_tile_kernel(inv_ref, xr_ref, xc_ref, rr_ref, rc_ref, out_ref, acc_ref):
    """One (TM, TN) output tile of K = exp(-||xi - xj||^2 / (2 sigma^2)).

    inv_ref : (1, 1)   SMEM scalar, 1 / sigma^2
    xr_ref  : (TM, TK) row block of centered X (bf16 or f32)
    xc_ref  : (TN, TK) col block of centered X (bf16 or f32)
    rr_ref  : (TM, 1)  scaled row norms  -||xi||^2 / (2 sigma^2)   (f32)
    rc_ref  : (1, TN)  scaled col norms  -||xj||^2 / (2 sigma^2)   (f32)
    out_ref : (TM, TN) output tile (f32)
    acc_ref : (TM, TN) f32 VMEM Gram accumulator (persists across the k axis)
    """
    k = pl.program_id(2)

    @pl.when(k == 0)
    def _():
        acc_ref[...] = jnp.zeros_like(acc_ref)

    # MXU: contraction on the last dim of BOTH operands -> no in-kernel
    # transpose / relayout of the column block; f32 accumulation.
    acc_ref[...] += lax.dot_general(
        xr_ref[...], xc_ref[...],
        dimension_numbers=(((1,), (1,)), ((), ())),
        preferred_element_type=jnp.float32)

    @pl.when(k == pl.num_programs(2) - 1)
    def _():
        # exponent = -(r_i + r_j - 2<xi,xj>) / (2 sigma^2)
        #          = rr_scaled + rc_scaled + gram / sigma^2
        e = rr_ref[...] + rc_ref[...] + acc_ref[...] * inv_ref[0, 0]
        # Clamp tiny positive cancellation error: exponent must be <= 0.
        out_ref[...] = jnp.exp(jnp.minimum(e, 0.0)).astype(out_ref.dtype)


def gaussian_kernel(x, sigma=None, track_running_stats=True, alpha=1.0,
                    use_bf16_matmul=True):
    """JAX/Pallas equivalent of GaussianKernel.forward.

    Args:
      x: (M, F) float array.
    Returns:
      (M, M) float32 Gaussian kernel matrix.
    """
    assert track_running_stats or sigma is not None
    m, f = x.shape

    # ---- cheap O(M*F) prologue in plain JAX --------------------------------
    xf = x.astype(jnp.float32)
    mu = jnp.mean(xf, axis=0, keepdims=True)
    xcen = xf - mu                       # exact for ||xi-xj||^2; kills
                                         # cancellation in sigma^2 and the Gram
    r = jnp.sum(xcen * xcen, axis=1)     # (M,) centered squared norms

    if track_running_stats:
        # mean_{i,j} ||xi - xj||^2 = (2/M) * sum_i ||x_i - mu||^2   (exact)
        sigma_sq = jnp.float32(alpha) * 2.0 * jnp.sum(r) / jnp.float32(m)
    else:
        sigma_sq = jnp.float32(float(sigma) * float(sigma))

    inv_sigma_sq = (1.0 / sigma_sq).reshape(1, 1).astype(jnp.float32)
    scale = -0.5 / sigma_sq                               # -1/(2 sigma^2)
    r_scaled = (r * scale).astype(jnp.float32)            # (M,)

    # ---- tiling: lane-dense output tiles, F-aware K-axis -------------------
    tm = tn = _choose_row_tile(m)
    m_pad = _round_up(m, tm)             # multiple of 128 -> unmasked stores

    if f > 1024:                         # keep X blocks small (v7x 64 MiB VMEM)
        tk = 512
        f_pad = _round_up(f, tk)
    else:
        tk = f                           # full-dim block (allowed for any F)
        f_pad = f

    x_mm_dtype = jnp.bfloat16 if use_bf16_matmul else jnp.float32
    x_mm = xcen.astype(x_mm_dtype)
    if m_pad != m or f_pad != f:
        x_mm = jnp.pad(x_mm, ((0, m_pad - m), (0, f_pad - f)))
    r_p = jnp.pad(r_scaled, (0, m_pad - m)) if m_pad != m else r_scaled
    r_row = r_p.reshape(m_pad, 1)
    r_col = r_p.reshape(1, m_pad)

    grid = (m_pad // tm, m_pad // tn, f_pad // tk)

    # ---- VMEM budget: computed from actual footprint + 25% headroom --------
    x_bytes = jnp.dtype(x_mm_dtype).itemsize
    need = (2 * (tm + tn) * tk * x_bytes      # double-buffered X blocks
            + 2 * tm * tn * 4                 # double-buffered output tile
            + tm * tn * 4                     # f32 Gram accumulator scratch
            + 2 * (tm + tn) * 4)              # norm side inputs
    vmem_limit = min(max(int(need * 1.25), 32 * 1024 * 1024),
                     56 * 1024 * 1024)        # stay under v7x's 64 MiB VMEM

    out = pl.pallas_call(
        _gauss_tile_kernel,
        out_shape=jax.ShapeDtypeStruct((m_pad, m_pad), jnp.float32),
        grid=grid,
        in_specs=[
            pl.BlockSpec((1, 1), lambda i, j, k: (0, 0),
                         memory_space=pltpu.MemorySpace.SMEM),      # 1/sigma^2
            pl.BlockSpec((tm, tk), lambda i, j, k: (i, k)),         # X rows
            pl.BlockSpec((tn, tk), lambda i, j, k: (j, k)),         # X cols
            pl.BlockSpec((tm, 1), lambda i, j, k: (i, 0)),          # scaled row norms
            pl.BlockSpec((1, tn), lambda i, j, k: (0, j)),          # scaled col norms
        ],
        out_specs=pl.BlockSpec((tm, tn), lambda i, j, k: (i, j)),
        scratch_shapes=[pltpu.VMEM((tm, tn), jnp.float32)],
        compiler_params=pltpu.CompilerParams(
            dimension_semantics=("parallel", "parallel", "arbitrary"),
            vmem_limit_bytes=vmem_limit,
        ),
    )(inv_sigma_sq, x_mm, x_mm, r_row, r_col)

    if m_pad != m:
        out = out[:m, :m]
    return out


def _reference(x, sigma=None, track_running_stats=True, alpha=1.0):
    """Pure-JAX reference mirroring the PyTorch forward exactly."""
    x = x.astype(jnp.float32)
    diff = x[None, :, :] - x[:, None, :]
    l2 = jnp.sum(diff * diff, axis=2)
    if track_running_stats:
        sigma_sq = alpha * jnp.mean(l2)
    else:
        sigma_sq = jnp.float32(sigma * sigma)
    return jnp.exp(-l2 / (2.0 * sigma_sq))


if __name__ == "__main__":
    key = jax.random.PRNGKey(0)
    M, F = 8, 32  # (minibatch, F) as in the module's contract
    x = jax.random.normal(key, (M, F), dtype=jnp.float32)

    # Path 1: track_running_stats=True, exact f32 MXU operands (tight tol).
    k1 = jax.block_until_ready(
        gaussian_kernel(x, track_running_stats=True, alpha=1.0,
                        use_bf16_matmul=False))
    ref1 = _reference(x, track_running_stats=True, alpha=1.0)
    assert k1.shape == (M, M)
    assert jnp.allclose(k1, ref1, atol=1e-5, rtol=1e-5), (
        float(jnp.max(jnp.abs(k1 - ref1))))

    # Path 2: default bf16 MXU operands (exponent error is O(F * 2^-8 / sigma^2),
    # so compare with a correspondingly looser tolerance).
    k2 = jax.block_until_ready(
        gaussian_kernel(x, track_running_stats=True, alpha=1.0))
    assert jnp.allclose(k2, ref1, atol=1e-2, rtol=1e-2), (
        float(jnp.max(jnp.abs(k2 - ref1))))

    # Path 3: fixed sigma (track_running_stats=False), f32 operands.
    k3 = jax.block_until_ready(
        gaussian_kernel(x, sigma=1.5, track_running_stats=False,
                        use_bf16_matmul=False))
    ref3 = _reference(x, sigma=1.5, track_running_stats=False)
    assert jnp.allclose(k3, ref3, atol=1e-5, rtol=1e-5), (
        float(jnp.max(jnp.abs(k3 - ref3))))

    print("KERNEL_OK")
</pallas_src>

<mosaic_0001>
module attributes {stable_mosaic.version = 11 : i64} {
  func.func @_gauss_tile_kernel(%arg0: i32, %arg1: i32, %arg2: i32, %arg3: memref<1x1xf32, #tpu.memory_space<smem>>, %arg4: memref<128x32xf32, #tpu.memory_space<vmem>>, %arg5: memref<128x32xf32, #tpu.memory_space<vmem>>, %arg6: memref<128x1xf32, #tpu.memory_space<vmem>>, %arg7: memref<1x128xf32, #tpu.memory_space<vmem>>, %arg8: memref<128x128xf32, #tpu.memory_space<vmem>>, %arg9: memref<128x128xf32, #tpu.memory_space<vmem>>) attributes {dimension_semantics = [#tpu.dimension_semantics<parallel>, #tpu.dimension_semantics<parallel>, #tpu.dimension_semantics<arbitrary>], iteration_bounds = array<i64: 1, 1, 1>, scalar_prefetch = 0 : i64, scratch_operands = 1 : i64, tpu.core_type = #tpu.core_type<tc>, window_params = [{transform_indices = @transform_0, window_bounds = array<i64: 1, 1>}, {transform_indices = @transform_1, window_bounds = array<i64: 128, 32>}, {transform_indices = @transform_2, window_bounds = array<i64: 128, 32>}, {transform_indices = @transform_3, window_bounds = array<i64: 128, 1>}, {transform_indices = @transform_4, window_bounds = array<i64: 1, 128>}, {transform_indices = @transform_5, window_bounds = array<i64: 128, 128>}]} {
    %c0_i32 = arith.constant 0 : i32
    %0 = arith.cmpi eq, %arg2, %c0_i32 : i32
    %1 = arith.extui %0 : i1 to i32
    %c0_i32_0 = arith.constant 0 : i32
    %2 = arith.cmpi ne, %1, %c0_i32_0 : i32
    scf.if %2 {
      %cst_10 = arith.constant 0.000000e+00 : f32
      %12 = vector.broadcast %cst_10 : f32 to vector<128x128xf32>
      %c0_11 = arith.constant 0 : index
      %c0_12 = arith.constant 0 : index
      %13 = vector.load %arg9[%c0_11, %c0_12] : memref<128x128xf32, #tpu.memory_space<vmem>>, vector<128x128xf32>
      tpu.vector_store %arg9[%c0_11, %c0_12], %12 {strides = array<i32>} : memref<128x128xf32, #tpu.memory_space<vmem>>, vector<128x128xf32>,
    } else {
    }
    %c0 = arith.constant 0 : index
    %c0_1 = arith.constant 0 : index
    %3 = vector.load %arg9[%c0, %c0_1] : memref<128x128xf32, #tpu.memory_space<vmem>>, vector<128x128xf32>
    %c0_2 = arith.constant 0 : index
    %c0_3 = arith.constant 0 : index
    %4 = vector.load %arg4[%c0_2, %c0_3] : memref<128x32xf32, #tpu.memory_space<vmem>>, vector<128x32xf32>
    %c0_4 = arith.constant 0 : index
    %c0_5 = arith.constant 0 : index
    %5 = vector.load %arg5[%c0_4, %c0_5] : memref<128x32xf32, #tpu.memory_space<vmem>>, vector<128x32xf32>
    %cst = arith.constant dense<0.000000e+00> : vector<128x128xf32>
    %6 = tpu.matmul %4, %5, %cst {dimension_numbers = #tpu.dot_dimension_numbers<[1], [1], [0], [0], [0, 0, 1, 0], [], []>} : vector<128x32xf32>, vector<128x32xf32>, vector<128x128xf32> -> vector<128x128xf32>
    %7 = arith.addf %3, %6 : vector<128x128xf32>
    %c0_6 = arith.constant 0 : index
    %c0_7 = arith.constant 0 : index
    %8 = vector.load %arg9[%c0_6, %c0_7] : memref<128x128xf32, #tpu.memory_space<vmem>>, vector<128x128xf32>
    tpu.vector_store %arg9[%c0_6, %c0_7], %7 {strides = array<i32>} : memref<128x128xf32, #tpu.memory_space<vmem>>, vector<128x128xf32>,
    %c0_i32_8 = arith.constant 0 : i32
    %9 = arith.cmpi eq, %arg2, %c0_i32_8 : i32
    %10 = arith.extui %9 : i1 to i32
    %c0_i32_9 = arith.constant 0 : i32
    %11 = arith.cmpi ne, %10, %c0_i32_9 : i32
    scf.if %11 {
      %c0_10 = arith.constant 0 : index
      %c0_11 = arith.constant 0 : index
      %12 = vector.load %arg6[%c0_10, %c0_11] : memref<128x1xf32, #tpu.memory_space<vmem>>, vector<128x1xf32>
      %c0_12 = arith.constant 0 : index
      %c0_13 = arith.constant 0 : index
      %13 = vector.load %arg7[%c0_12, %c0_13] : memref<1x128xf32, #tpu.memory_space<vmem>>, vector<1x128xf32>
      %14 = vector.broadcast %12 : vector<128x1xf32> to vector<128x128xf32>
      %15 = vector.broadcast %13 : vector<1x128xf32> to vector<128x128xf32>
      %16 = arith.addf %14, %15 : vector<128x128xf32>
      %c0_14 = arith.constant 0 : index
      %c0_15 = arith.constant 0 : index
      %17 = vector.load %arg9[%c0_14, %c0_15] : memref<128x128xf32, #tpu.memory_space<vmem>>, vector<128x128xf32>
      %c0_16 = arith.constant 0 : index
      %c0_17 = arith.constant 0 : index
      %18 = memref.load %arg3[%c0_16, %c0_17] : memref<1x1xf32, #tpu.memory_space<smem>>
      %19 = vector.broadcast %18 : f32 to vector<128x128xf32>
      %20 = arith.mulf %17, %19 : vector<128x128xf32>
      %21 = arith.addf %16, %20 : vector<128x128xf32>
      %cst_18 = arith.constant 0.000000e+00 : f32
      %22 = vector.broadcast %cst_18 : f32 to vector<128x128xf32>
      %23 = arith.minimumf %21, %22 : vector<128x128xf32>
      %24 = math.exp %23 : vector<128x128xf32>
      %c0_19 = arith.constant 0 : index
      %c0_20 = arith.constant 0 : index
      %25 = vector.load %arg8[%c0_19, %c0_20] : memref<128x128xf32, #tpu.memory_space<vmem>>, vector<128x128xf32>
      tpu.vector_store %arg8[%c0_19, %c0_20], %24 {strides = array<i32>} : memref<128x128xf32, #tpu.memory_space<vmem>>, vector<128x128xf32>,
    } else {
    }
    return
  }
  func.func @transform_0(%arg0: i32, %arg1: i32, %arg2: i32) -> (i32, i32) {
    %c0_i32 = arith.constant 0 : i32
    %c0_i32_0 = arith.constant 0 : i32
    %c0_i32_1 = arith.constant 0 : i32
    return %c0_i32, %c0_i32_0 : i32, i32
  }
  func.func @transform_1(%arg0: i32, %arg1: i32, %arg2: i32) -> (i32, i32) {
    %c0_i32 = arith.constant 0 : i32
    return %arg0, %arg2 : i32, i32
  }
  func.func @transform_2(%arg0: i32, %arg1: i32, %arg2: i32) -> (i32, i32) {
    %c0_i32 = arith.constant 0 : i32
    return %arg1, %arg2 : i32, i32
  }
  func.func @transform_3(%arg0: i32, %arg1: i32, %arg2: i32) -> (i32, i32) {
    %c0_i32 = arith.constant 0 : i32
    %c0_i32_0 = arith.constant 0 : i32
    return %arg0, %c0_i32 : i32, i32
  }
  func.func @transform_4(%arg0: i32, %arg1: i32, %arg2: i32) -> (i32, i32) {
    %c0_i32 = arith.constant 0 : i32
    %c0_i32_0 = arith.constant 0 : i32
    return %c0_i32, %arg1 : i32, i32
  }
  func.func @transform_5(%arg0: i32, %arg1: i32, %arg2: i32) -> (i32, i32) {
    %c0_i32 = arith.constant 0 : i32
    return %arg0, %arg1 : i32, i32
  }
}

</mosaic_0001>

<llo_original>
// kernel: tpu_custom_call.1
$region0: #{tpu_custom_call.1}
  #allocation0 [shape = 'u32[]', space=smem, size = 0x4, offset = 0x4, fixed_abs, tag = 'smem constant byte address 0x4 - core index']
  #allocation1 [shape = 'u32[72,128]{1,0:T(1,128)}', space=vmem, size = 0x9000, scoped, tag = 'internal scratch']
  #allocation2 [shape = 'f32[128,128]{1,0:T(8,128)}', space=vmem, size = 0x10000, scoped, tag = 'scratch operand']
  #allocation3 [shape = 'f32[1,1]{1,0:T(1,128)S(6)}', space=smem, size = 0x200, scoped, tag = 'scoped memory for tpu_custom_call.1']
  %s0 = inlined_call_operand.<no memory space> [shape: f32[1,1], index: 0, kind: input, shape index: {}]
  %s1 = inlined_call_operand.vmem [shape: f32[128,32], index: 1, kind: input, shape index: {}]
  %s2 = inlined_call_operand.vmem [shape: f32[128,32], index: 2, kind: input, shape index: {}]
  %s3 = inlined_call_operand.vmem [shape: f32[128,1], index: 3, kind: input, shape index: {}]
  %s4 = inlined_call_operand.vmem [shape: f32[1,128], index: 4, kind: input, shape index: {}]
  %s5 = inlined_call_operand.hbm [shape: f32[128,128], index: 5, kind: output, shape index: {}]
  %s6 = sld [smem:[#allocation0]]
  $region38: #{tpu_custom_call.1} parent=0
    _
  %s8 = ssub.s32 1, %s6
  %s9 = scalar_select 0, %s8, %s6
  %10 = sst [smem:[#allocation3]] %s0
  $region1: #{tpu_custom_call.1} parent=0
    #allocation4 [shape = 'u8[65536]{0}', space=vmem, size = 0x10000, scoped, tag = 'output window, operand 0, single buffered']
    #allocation5 [shape = 's32[1]{0}', space=sflag, size = 0x4, scoped, tag = 'scoped memory for tpu_custom_call.1']
    %11 = vsyncpa [#allocation5], 0
    // Predicated region
    $region2: #{tpu_custom_call.1} parent=1 // pred_check
      _
    $region3: #{tpu_custom_call.1} parent=1 // pred_check_branch
      %13 = sbr.rel (0) target = $region5
    $region4: #{tpu_custom_call.1} parent=1 // pred_region
      _
    $region5: #{tpu_custom_call.1} parent=1 // pred_fallthru
      _
    // Predicated region
    $region6: #{tpu_custom_call.1} parent=1 // pred_check
      _
    $region7: #{tpu_custom_call.1} parent=1 // pred_check_branch
      %15 = sbr.rel (0) target = $region9
    $region8: #{tpu_custom_call.1} parent=1 // pred_region
      _
    $region9: #{tpu_custom_call.1} parent=1 // pred_fallthru
      _
    // Predicated region
    $region10: #{tpu_custom_call.1} parent=1 // pred_check
      _
    $region11: #{tpu_custom_call.1} parent=1 // pred_check_branch
      %17 = sbr.rel (0) target = $region13
    $region12: #{tpu_custom_call.1} parent=1 // pred_region
      _
    $region13: #{tpu_custom_call.1} parent=1 // pred_fallthru
      _
    // Predicated region
    $region14: #{tpu_custom_call.1} parent=1 // pred_check
      _
    $region15: #{tpu_custom_call.1} parent=1 // pred_check_branch
      %19 = sbr.rel (0) target = $region17
    $region16: #{tpu_custom_call.1} parent=1 // pred_region
      _
    $region17: #{tpu_custom_call.1} parent=1 // pred_fallthru
      _
    // Predicated region
    $region18: #{tpu_custom_call.1} parent=1 // pred_check
      _
    $region19: #{tpu_custom_call.1} parent=1 // pred_check_branch
      %21 = sbr.rel (0) target = $region21
    $region20: #{tpu_custom_call.1} parent=1 // pred_region
      _
    $region21: #{tpu_custom_call.1} parent=1 // pred_fallthru
      _
    %p22 = scmp.eq.s32.totalorder 0, 0
    // Predicated region
    $region22: #{tpu_custom_call.1} parent=1 // pred_check
      %p23 = pneg %p22
    $region23: #{tpu_custom_call.1} parent=1 // pred_check_branch
      %25 = sbr.rel (%p23) target = $region25
    $region24: #{tpu_custom_call.1} parent=1 // pred_region
      %26 = vst [vmem:[#allocation2] sm:$0xff] 0.0
      %27 = vst [vmem:[#allocation2 + $0x8] sm:$0xff] 0.0
      %28 = vst [vmem:[#allocation2 + $0x10] sm:$0xff] 0.0
      %29 = vst [vmem:[#allocation2 + $0x18] sm:$0xff] 0.0
      %30 = vst [vmem:[#allocation2 + $0x20] sm:$0xff] 0.0
      %31 = vst [vmem:[#allocation2 + $0x28] sm:$0xff] 0.0
      %32 = vst [vmem:[#allocation2 + $0x30] sm:$0xff] 0.0
      %33 = vst [vmem:[#allocation2 + $0x38] sm:$0xff] 0.0
      %34 = vst [vmem:[#allocation2 + $0x40] sm:$0xff] 0.0
      %35 = vst [vmem:[#allocation2 + $0x48] sm:$0xff] 0.0
      %36 = vst [vmem:[#allocation2 + $0x50] sm:$0xff] 0.0
      %37 = vst [vmem:[#allocation2 + $0x58] sm:$0xff] 0.0
      %38 = vst [vmem:[#allocation2 + $0x60] sm:$0xff] 0.0
      %39 = vst [vmem:[#allocation2 + $0x68] sm:$0xff] 0.0
      %40 = vst [vmem:[#allocation2 + $0x70] sm:$0xff] 0.0
      %41 = vst [vmem:[#allocation2 + $0x78] sm:$0xff] 0.0
    $region25: #{tpu_custom_call.1} parent=1 // pred_fallthru
      _
    %v42 = vld [vmem:[#allocation2] sm:$0xff]
    %v43 = vld [vmem:[#allocation2 + $0x8] sm:$0xff]
    %v44 = vld [vmem:[#allocation2 + $0x10] sm:$0xff]
    %v45 = vld [vmem:[#allocation2 + $0x18] sm:$0xff]
    %v46 = vld [vmem:[#allocation2 + $0x20] sm:$0xff]
    %v47 = vld [vmem:[#allocation2 + $0x28] sm:$0xff]
    %v48 = vld [vmem:[#allocation2 + $0x30] sm:$0xff]
    %v49 = vld [vmem:[#allocation2 + $0x38] sm:$0xff]
    %v50 = vld [vmem:[#allocation2 + $0x40] sm:$0xff]
    %v51 = vld [vmem:[#allocation2 + $0x48] sm:$0xff]
    %v52 = vld [vmem:[#allocation2 + $0x50] sm:$0xff]
    %v53 = vld [vmem:[#allocation2 + $0x58] sm:$0xff]
    %v54 = vld [vmem:[#allocation2 + $0x60] sm:$0xff]
    %v55 = vld [vmem:[#allocation2 + $0x68] sm:$0xff]
    %v56 = vld [vmem:[#allocation2 + $0x70] sm:$0xff]
    %v57 = vld [vmem:[#allocation2 + $0x78] sm:$0xff]
    %v58 = vld [vmem:[%s1] sm:$0xff]
    %v59 = vld [vmem:[%s1 + $0x8] sm:$0xff]
    %v60 = vld [vmem:[%s1 + $0x10] sm:$0xff]
    %v61 = vld [vmem:[%s1 + $0x18] sm:$0xff]
    %v62 = vld [vmem:[%s1 + $0x20] sm:$0xff]
    %v63 = vld [vmem:[%s1 + $0x28] sm:$0xff]
    %v64 = vld [vmem:[%s1 + $0x30] sm:$0xff]
    %v65 = vld [vmem:[%s1 + $0x38] sm:$0xff]
    %v66 = vld [vmem:[%s1 + $0x40] sm:$0xff]
    %v67 = vld [vmem:[%s1 + $0x48] sm:$0xff]
    %v68 = vld [vmem:[%s1 + $0x50] sm:$0xff]
    %v69 = vld [vmem:[%s1 + $0x58] sm:$0xff]
    %v70 = vld [vmem:[%s1 + $0x60] sm:$0xff]
    %v71 = vld [vmem:[%s1 + $0x68] sm:$0xff]
    %v72 = vld [vmem:[%s1 + $0x70] sm:$0xff]
    %v73 = vld [vmem:[%s1 + $0x78] sm:$0xff]
    %v74 = vld [vmem:[%s2] sm:$0xff]
    %v75 = vld [vmem:[%s2 + $0x8] sm:$0xff]
    %v76 = vld [vmem:[%s2 + $0x10] sm:$0xff]
    %v77 = vld [vmem:[%s2 + $0x18] sm:$0xff]
    %v78 = vld [vmem:[%s2 + $0x20] sm:$0xff]
    %v79 = vld [vmem:[%s2 + $0x28] sm:$0xff]
    %v80 = vld [vmem:[%s2 + $0x30] sm:$0xff]
    %v81 = vld [vmem:[%s2 + $0x38] sm:$0xff]
    %v82 = vld [vmem:[%s2 + $0x40] sm:$0xff]
    %v83 = vld [vmem:[%s2 + $0x48] sm:$0xff]
    %v84 = vld [vmem:[%s2 + $0x50] sm:$0xff]
    %v85 = vld [vmem:[%s2 + $0x58] sm:$0xff]
    %v86 = vld [vmem:[%s2 + $0x60] sm:$0xff]
    %v87 = vld [vmem:[%s2 + $0x68] sm:$0xff]
    %v88 = vld [vmem:[%s2 + $0x70] sm:$0xff]
    %v89 = vld [vmem:[%s2 + $0x78] sm:$0xff]
    %vm90 = vcmask 261120
    %v92 = vsel %vm90, %v58, 0
    %v95 = vsel %vm90, %v59, 0
    %v98 = vsel %vm90, %v60, 0
    %v101 = vsel %vm90, %v61, 0
    %v104 = vsel %vm90, %v62, 0
    %v107 = vsel %vm90, %v63, 0
    %v110 = vsel %vm90, %v64, 0
    %v113 = vsel %vm90, %v65, 0
    %v116 = vsel %vm90, %v66, 0
    %v119 = vsel %vm90, %v67, 0
    %v122 = vsel %vm90, %v68, 0
    %v125 = vsel %vm90, %v69, 0
    %v128 = vsel %vm90, %v70, 0
    %v131 = vsel %vm90, %v71, 0
    %v134 = vsel %vm90, %v72, 0
    %v137 = vsel %vm90, %v73, 0
    %v140 = vsel %vm90, %v74, 0
    %v143 = vsel %vm90, %v75, 0
    %v146 = vsel %vm90, %v76, 0
    %v149 = vsel %vm90, %v77, 0
    %v152 = vsel %vm90, %v78, 0
    %v155 = vsel %vm90, %v79, 0
    %v158 = vsel %vm90, %v80, 0
    %v161 = vsel %vm90, %v81, 0
    %v164 = vsel %vm90, %v82, 0
    %v167 = vsel %vm90, %v83, 0
    %v170 = vsel %vm90, %v84, 0
    %v173 = vsel %vm90, %v85, 0
    %v176 = vsel %vm90, %v86, 0
    %v179 = vsel %vm90, %v87, 0
    %v182 = vsel %vm90, %v88, 0
    %v185 = vsel %vm90, %v89, 0
    %187 = vmatpush.xpose.msra.mxu0 %v185
    %188 = vmatpush.xpose.msra.mxu0 %v182
    %189 = vmatpush.xpose.msra.mxu0 %v179
    %190 = vmatpush.xpose.msra.mxu0 %v176
    %191 = vmatpush.xpose.msra.mxu0 %v173
    %192 = vmatpush.xpose.msra.mxu0 %v170
    %193 = vmatpush.xpose.msra.mxu0 %v167
    %194 = vmatpush.xpose.msra.mxu0 %v164
    %195 = vmatpush.xpose.msra.mxu0 %v161
    %196 = vmatpush.xpose.msra.mxu0 %v158
    %197 = vmatpush.xpose.msra.mxu0 %v155
    %198 = vmatpush.xpose.msra.mxu0 %v152
    %199 = vmatpush.xpose.msra.mxu0 %v149
    %200 = vmatpush.xpose.msra.mxu0 %v146
    %201 = vmatpush.xpose.msra.mxu0 %v143
    %202 = vmatpush.xpose.msra.mxu0 %v140
    %203 = vmatmul.f32.gmra.mxu0 %v92
    %v204 = vpop.f32.mrf.mxu0
    %v205 = vadd.f32 0.0, %v204
    %206 = vmatmul.f32.gmra.mxu0 %v95
    %v207 = vpop.f32.mrf.mxu0
    %v208 = vadd.f32 0.0, %v207
    %209 = vmatmul.f32.gmra.mxu0 %v98
    %v210 = vpop.f32.mrf.mxu0
    %v211 = vadd.f32 0.0, %v210
    %212 = vmatmul.f32.gmra.mxu0 %v101
    %v213 = vpop.f32.mrf.mxu0
    %v214 = vadd.f32 0.0, %v213
    %215 = vmatmul.f32.gmra.mxu0 %v104
    %v216 = vpop.f32.mrf.mxu0
    %v217 = vadd.f32 0.0, %v216
    %218 = vmatmul.f32.gmra.mxu0 %v107
    %v219 = vpop.f32.mrf.mxu0
    %v220 = vadd.f32 0.0, %v219
    %221 = vmatmul.f32.gmra.mxu0 %v110
    %v222 = vpop.f32.mrf.mxu0
    %v223 = vadd.f32 0.0, %v222
    %224 = vmatmul.f32.gmra.mxu0 %v113
    %v225 = vpop.f32.mrf.mxu0
    %v226 = vadd.f32 0.0, %v225
    %227 = vmatmul.f32.gmra.mxu0 %v116
    %v228 = vpop.f32.mrf.mxu0
    %v229 = vadd.f32 0.0, %v228
    %230 = vmatmul.f32.gmra.mxu0 %v119
    %v231 = vpop.f32.mrf.mxu0
    %v232 = vadd.f32 0.0, %v231
    %233 = vmatmul.f32.gmra.mxu0 %v122
    %v234 = vpop.f32.mrf.mxu0
    %v235 = vadd.f32 0.0, %v234
    %236 = vmatmul.f32.gmra.mxu0 %v125
    %v237 = vpop.f32.mrf.mxu0
    %v238 = vadd.f32 0.0, %v237
    %239 = vmatmul.f32.gmra.mxu0 %v128
    %v240 = vpop.f32.mrf.mxu0
    %v241 = vadd.f32 0.0, %v240
    %242 = vmatmul.f32.gmra.mxu0 %v131
    %v243 = vpop.f32.mrf.mxu0
    %v244 = vadd.f32 0.0, %v243
    %245 = vmatmul.f32.gmra.mxu0 %v134
    %v246 = vpop.f32.mrf.mxu0
    %v247 = vadd.f32 0.0, %v246
    %248 = vmatmul.f32.gmra.mxu0 %v137
    %v249 = vpop.f32.mrf.mxu0
    %v250 = vadd.f32 0.0, %v249
    %251 = vdwg.mxu0
    %v252 = vadd.f32 %v42, %v205
    %v253 = vadd.f32 %v43, %v208
    %v254 = vadd.f32 %v44, %v211
    %v255 = vadd.f32 %v45, %v214
    %v256 = vadd.f32 %v46, %v217
    %v257 = vadd.f32 %v47, %v220
    %v258 = vadd.f32 %v48, %v223
    %v259 = vadd.f32 %v49, %v226
    %v260 = vadd.f32 %v50, %v229
    %v261 = vadd.f32 %v51, %v232
    %v262 = vadd.f32 %v52, %v235
    %v263 = vadd.f32 %v53, %v238
    %v264 = vadd.f32 %v54, %v241
    %v265 = vadd.f32 %v55, %v244
    %v266 = vadd.f32 %v56, %v247
    %v267 = vadd.f32 %v57, %v250
    %268 = vst [vmem:[#allocation2] sm:$0xff] %v252
    %269 = vst [vmem:[#allocation2 + $0x8] sm:$0xff] %v253
    %270 = vst [vmem:[#allocation2 + $0x10] sm:$0xff] %v254
    %271 = vst [vmem:[#allocation2 + $0x18] sm:$0xff] %v255
    %272 = vst [vmem:[#allocation2 + $0x20] sm:$0xff] %v256
    %273 = vst [vmem:[#allocation2 + $0x28] sm:$0xff] %v257
    %274 = vst [vmem:[#allocation2 + $0x30] sm:$0xff] %v258
    %275 = vst [vmem:[#allocation2 + $0x38] sm:$0xff] %v259
    %276 = vst [vmem:[#allocation2 + $0x40] sm:$0xff] %v260
    %277 = vst [vmem:[#allocation2 + $0x48] sm:$0xff] %v261
    %278 = vst [vmem:[#allocation2 + $0x50] sm:$0xff] %v262
    %279 = vst [vmem:[#allocation2 + $0x58] sm:$0xff] %v263
    %280 = vst [vmem:[#allocation2 + $0x60] sm:$0xff] %v264
    %281 = vst [vmem:[#allocation2 + $0x68] sm:$0xff] %v265
    %282 = vst [vmem:[#allocation2 + $0x70] sm:$0xff] %v266
    %283 = vst [vmem:[#allocation2 + $0x78] sm:$0xff] %v267
    // Predicated region
    $region26: #{tpu_custom_call.1} parent=1 // pred_check
      %p284 = pneg %p22
    $region27: #{tpu_custom_call.1} parent=1 // pred_check_branch
      %286 = sbr.rel (%p284) target = $region29
    $region28: #{tpu_custom_call.1} parent=1 // pred_region
      %v287 = vld [vmem:[%s3] sm:$0xff]
      %v288 = vld [vmem:[%s3 + $0x8] sm:$0xff]
      %v289 = vld [vmem:[%s3 + $0x10] sm:$0xff]
      %v290 = vld [vmem:[%s3 + $0x18] sm:$0xff]
      %v291 = vld [vmem:[%s3 + $0x20] sm:$0xff]
      %v292 = vld [vmem:[%s3 + $0x28] sm:$0xff]
      %v293 = vld [vmem:[%s3 + $0x30] sm:$0xff]
      %v294 = vld [vmem:[%s3 + $0x38] sm:$0xff]
      %v295 = vld [vmem:[%s3 + $0x40] sm:$0xff]
      %v296 = vld [vmem:[%s3 + $0x48] sm:$0xff]
      %v297 = vld [vmem:[%s3 + $0x50] sm:$0xff]
      %v298 = vld [vmem:[%s3 + $0x58] sm:$0xff]
      %v299 = vld [vmem:[%s3 + $0x60] sm:$0xff]
      %v300 = vld [vmem:[%s3 + $0x68] sm:$0xff]
      %v301 = vld [vmem:[%s3 + $0x70] sm:$0xff]
      %v302 = vld [vmem:[%s3 + $0x78] sm:$0xff]
      %v303 = vld [vmem:[%s4] sm:$0x1]
      %305 = vset.pattern.permute.xlu0 0
      %306 = vperm.xlu0 %305, %v287
      %v307 = vpop.permute.xlu0 %306
      %310 = vset.pattern.permute.xlu0 0
      %311 = vperm.xlu0 %310, %v288
      %v312 = vpop.permute.xlu0 %311
      %315 = vset.pattern.permute.xlu0 0
      %316 = vperm.xlu0 %315, %v289
      %v317 = vpop.permute.xlu0 %316
      %320 = vset.pattern.permute.xlu0 0
      %321 = vperm.xlu0 %320, %v290
      %v322 = vpop.permute.xlu0 %321
      %325 = vset.pattern.permute.xlu0 0
      %326 = vperm.xlu0 %325, %v291
      %v327 = vpop.permute.xlu0 %326
      %330 = vset.pattern.permute.xlu0 0
      %331 = vperm.xlu0 %330, %v292
      %v332 = vpop.permute.xlu0 %331
      %335 = vset.pattern.permute.xlu0 0
      %336 = vperm.xlu0 %335, %v293
      %v337 = vpop.permute.xlu0 %336
      %340 = vset.pattern.permute.xlu0 0
      %341 = vperm.xlu0 %340, %v294
      %v342 = vpop.permute.xlu0 %341
      %345 = vset.pattern.permute.xlu0 0
      %346 = vperm.xlu0 %345, %v295
      %v347 = vpop.permute.xlu0 %346
      %350 = vset.pattern.permute.xlu0 0
      %351 = vperm.xlu0 %350, %v296
      %v352 = vpop.permute.xlu0 %351
      %355 = vset.pattern.permute.xlu0 0
      %356 = vperm.xlu0 %355, %v297
      %v357 = vpop.permute.xlu0 %356
      %360 = vset.pattern.permute.xlu0 0
      %361 = vperm.xlu0 %360, %v298
      %v362 = vpop.permute.xlu0 %361
      %365 = vset.pattern.permute.xlu0 0
      %366 = vperm.xlu0 %365, %v299
      %v367 = vpop.permute.xlu0 %366
      %370 = vset.pattern.permute.xlu0 0
      %371 = vperm.xlu0 %370, %v300
      %v372 = vpop.permute.xlu0 %371
      %375 = vset.pattern.permute.xlu0 0
      %376 = vperm.xlu0 %375, %v301
      %v377 = vpop.permute.xlu0 %376
      %380 = vset.pattern.permute.xlu0 0
      %381 = vperm.xlu0 %380, %v302
      %v382 = vpop.permute.xlu0 %381
      %v385 = vperm.slane %v303, 0
      %v387 = vadd.f32 %v307, %v385
      %v388 = vadd.f32 %v312, %v385
      %v389 = vadd.f32 %v317, %v385
      %v390 = vadd.f32 %v322, %v385
      %v391 = vadd.f32 %v327, %v385
      %v392 = vadd.f32 %v332, %v385
      %v393 = vadd.f32 %v337, %v385
      %v394 = vadd.f32 %v342, %v385
      %v395 = vadd.f32 %v347, %v385
      %v396 = vadd.f32 %v352, %v385
      %v397 = vadd.f32 %v357, %v385
      %v398 = vadd.f32 %v362, %v385
      %v399 = vadd.f32 %v367, %v385
      %v400 = vadd.f32 %v372, %v385
      %v401 = vadd.f32 %v377, %v385
      %v402 = vadd.f32 %v382, %v385
      %v403 = vld [vmem:[#allocation2] sm:$0xff]
      %v404 = vld [vmem:[#allocation2 + $0x8] sm:$0xff]
      %v405 = vld [vmem:[#allocation2 + $0x10] sm:$0xff]
      %v406 = vld [vmem:[#allocation2 + $0x18] sm:$0xff]
      %v407 = vld [vmem:[#allocation2 + $0x20] sm:$0xff]
      %v408 = vld [vmem:[#allocation2 + $0x28] sm:$0xff]
      %v409 = vld [vmem:[#allocation2 + $0x30] sm:$0xff]
      %v410 = vld [vmem:[#allocation2 + $0x38] sm:$0xff]
      %v411 = vld [vmem:[#allocation2 + $0x40] sm:$0xff]
      %v412 = vld [vmem:[#allocation2 + $0x48] sm:$0xff]
      %v413 = vld [vmem:[#allocation2 + $0x50] sm:$0xff]
      %v414 = vld [vmem:[#allocation2 + $0x58] sm:$0xff]
      %v415 = vld [vmem:[#allocation2 + $0x60] sm:$0xff]
      %v416 = vld [vmem:[#allocation2 + $0x68] sm:$0xff]
      %v417 = vld [vmem:[#allocation2 + $0x70] sm:$0xff]
      %v418 = vld [vmem:[#allocation2 + $0x78] sm:$0xff]
      %s419 = sld [smem:[#allocation3]]
      %v420 = vstv %s419
      %v421 = vmul.f32 %v403, %v420
      %v422 = vmul.f32 %v404, %v420
      %v423 = vmul.f32 %v405, %v420
      %v424 = vmul.f32 %v406, %v420
      %v425 = vmul.f32 %v407, %v420
      %v426 = vmul.f32 %v408, %v420
      %v427 = vmul.f32 %v409, %v420
      %v428 = vmul.f32 %v410, %v420
      %v429 = vmul.f32 %v411, %v420
      %v430 = vmul.f32 %v412, %v420
      %v431 = vmul.f32 %v413, %v420
      %v432 = vmul.f32 %v414, %v420
      %v433 = vmul.f32 %v415, %v420
      %v434 = vmul.f32 %v416, %v420
      %v435 = vmul.f32 %v417, %v420
      %v436 = vmul.f32 %v418, %v420
      %v437 = vadd.f32 %v387, %v421
      %v438 = vadd.f32 %v388, %v422
      %v439 = vadd.f32 %v389, %v423
      %v440 = vadd.f32 %v390, %v424
      %v441 = vadd.f32 %v391, %v425
      %v442 = vadd.f32 %v392, %v426
      %v443 = vadd.f32 %v393, %v427
      %v444 = vadd.f32 %v394, %v428
      %v445 = vadd.f32 %v395, %v429
      %v446 = vadd.f32 %v396, %v430
      %v447 = vadd.f32 %v397, %v431
      %v448 = vadd.f32 %v398, %v432
      %v449 = vadd.f32 %v399, %v433
      %v450 = vadd.f32 %v400, %v434
      %v451 = vadd.f32 %v401, %v435
      %v452 = vadd.f32 %v402, %v436
      %v453 = vmin.f32 %v437, 0.0
      %v454 = vmin.f32 %v438, 0.0
      %v455 = vmin.f32 %v439, 0.0
      %v456 = vmin.f32 %v440, 0.0
      %v457 = vmin.f32 %v441, 0.0
      %v458 = vmin.f32 %v442, 0.0
      %v459 = vmin.f32 %v443, 0.0
      %v460 = vmin.f32 %v444, 0.0
      %v461 = vmin.f32 %v445, 0.0
      %v462 = vmin.f32 %v446, 0.0
      %v463 = vmin.f32 %v447, 0.0
      %v464 = vmin.f32 %v448, 0.0
      %v465 = vmin.f32 %v449, 0.0
      %v466 = vmin.f32 %v450, 0.0
      %v467 = vmin.f32 %v451, 0.0
      %v468 = vmin.f32 %v452, 0.0
      %v469 = vmul.f32 %v453, 1.442695
      %v470 = vpow.pop %v469
      %v471 = vmul.f32 %v454, 1.442695
      %v472 = vpow.pop %v471
      %v473 = vmul.f32 %v455, 1.442695
      %v474 = vpow.pop %v473
      %v475 = vmul.f32 %v456, 1.442695
      %v476 = vpow.pop %v475
      %v477 = vmul.f32 %v457, 1.442695
      %v478 = vpow.pop %v477
      %v479 = vmul.f32 %v458, 1.442695
      %v480 = vpow.pop %v479
      %v481 = vmul.f32 %v459, 1.442695
      %v482 = vpow.pop %v481
      %v483 = vmul.f32 %v460, 1.442695
      %v484 = vpow.pop %v483
      %v485 = vmul.f32 %v461, 1.442695
      %v486 = vpow.pop %v485
      %v487 = vmul.f32 %v462, 1.442695
      %v488 = vpow.pop %v487
      %v489 = vmul.f32 %v463, 1.442695
      %v490 = vpow.pop %v489
      %v491 = vmul.f32 %v464, 1.442695
      %v492 = vpow.pop %v491
      %v493 = vmul.f32 %v465, 1.442695
      %v494 = vpow.pop %v493
      %v495 = vmul.f32 %v466, 1.442695
      %v496 = vpow.pop %v495
      %v497 = vmul.f32 %v467, 1.442695
      %v498 = vpow.pop %v497
      %v499 = vmul.f32 %v468, 1.442695
      %v500 = vpow.pop %v499
      %501 = vst [vmem:[#allocation4] sm:$0xff] %v470
      %502 = vst [vmem:[#allocation4 + $0x8] sm:$0xff] %v472
      %503 = vst [vmem:[#allocation4 + $0x10] sm:$0xff] %v474
      %504 = vst [vmem:[#allocation4 + $0x18] sm:$0xff] %v476
      %505 = vst [vmem:[#allocation4 + $0x20] sm:$0xff] %v478
      %506 = vst [vmem:[#allocation4 + $0x28] sm:$0xff] %v480
      %507 = vst [vmem:[#allocation4 + $0x30] sm:$0xff] %v482
      %508 = vst [vmem:[#allocation4 + $0x38] sm:$0xff] %v484
      %509 = vst [vmem:[#allocation4 + $0x40] sm:$0xff] %v486
      %510 = vst [vmem:[#allocation4 + $0x48] sm:$0xff] %v488
      %511 = vst [vmem:[#allocation4 + $0x50] sm:$0xff] %v490
      %512 = vst [vmem:[#allocation4 + $0x58] sm:$0xff] %v492
      %513 = vst [vmem:[#allocation4 + $0x60] sm:$0xff] %v494
      %514 = vst [vmem:[#allocation4 + $0x68] sm:$0xff] %v496
      %515 = vst [vmem:[#allocation4 + $0x70] sm:$0xff] %v498
      %516 = vst [vmem:[#allocation4 + $0x78] sm:$0xff] %v500
    $region29: #{tpu_custom_call.1} parent=1 // pred_fallthru
      _
    // Predicated region
    $region30: #{tpu_custom_call.1} parent=1 // pred_check
      _
    $region31: #{tpu_custom_call.1} parent=1 // pred_check_branch
      %518 = sbr.rel (0) target = $region33
    $region32: #{tpu_custom_call.1} parent=1 // pred_region
      %520 = vsyncadd [#allocation5], 0
      %s521 = sshll.u32 [#allocation4], 4
      %s522 = int_to_ptr.vmem [resolvable:$true] %s521
      %s523 = sshll.u32 %s5, 4
      %s524 = int_to_ptr.hbm [resolvable:$true] %s523
      %529 = dma.vmem_to_hbm [thread:$0]  %s522, 2048, %s524, [#allocation5], 128, 128, 8
    $region33: #{tpu_custom_call.1} parent=1 // pred_fallthru
      _
    // Predicated region
    $region34: #{tpu_custom_call.1} parent=1 // pred_check
      _
    $region35: #{tpu_custom_call.1} parent=1 // pred_check_branch
      %531 = sbr.rel (0) target = $region37
    $region36: #{tpu_custom_call.1} parent=1 // pred_region
      %533 = dma.done [#allocation5], 2048
    $region37: #{tpu_custom_call.1} parent=1 // pred_fallthru
      _
    %534 = vsyncpa [#allocation5], 1

</llo_original>
